<compile_context>
chip_gen: v7x
topology: tpu7x:2x2x1
jax: 0.10.0
libtpu: 0.0.40
codegen_flags: <defaults>
</compile_context>

<pallas_src>
import jax
import jax.numpy as jnp
from jax.experimental import pallas as pl
from jax.experimental.pallas import tpu as pltpu


MAX_TILE_B = 512  # cap so large batches pipeline (>=2 grid steps for v7x megacore)


def _round_up(x, m):
    return ((x + m - 1) // m) * m


def _emb_split_kernel(d1i_ref, d2i_ref, ci_ref,
                      drug_tbl_ref, cell_tbl_ref,
                      w1_ref, b1_ref, w2_ref, b2_ref, w3_ref, b3_ref,
                      out_ref):
    """One batch tile: in-VMEM gather + L2-normalize + merged 3-layer MLP."""
    f32 = jnp.float32
    tb = out_ref.shape[0]

    def gather(idx_ref, tbl_ref):
        # Exact one-hot gather on the MXU: rows = onehot(idx) @ table.
        # Tables are VMEM-resident, so no HBM activation round trip.
        nrows = tbl_ref.shape[0]
        iota = jax.lax.broadcasted_iota(jnp.int32, (tb, nrows), 1)
        onehot = (iota == idx_ref[...]).astype(f32)          # (tb, nrows)
        return jnp.dot(onehot, tbl_ref[...], preferred_element_type=f32)

    def l2norm(x):
        # torch F.normalize(x, p=2, dim=1): x / max(||x||_2, 1e-12).
        norm = jnp.sqrt(jnp.sum(x * x, axis=1, keepdims=True))
        return x / jnp.maximum(norm, 1e-12)

    d1n = l2norm(gather(d1i_ref, drug_tbl_ref))
    d2n = l2norm(gather(d2i_ref, drug_tbl_ref))
    cn = l2norm(gather(ci_ref, cell_tbl_ref))

    # Layer 1 as ONE merged matmul over the assembled (tb, 3H) lhs
    # (single set of MXU pushes instead of three K=H pushes + VALU adds).
    x = jnp.concatenate([d1n, d2n, cn], axis=1)
    h1 = jnp.dot(x, w1_ref[...], preferred_element_type=f32) + b1_ref[...]
    h1 = jnp.maximum(h1, 0.0)

    h2 = jnp.dot(h1, w2_ref[...], preferred_element_type=f32) + b2_ref[...]
    h2 = jnp.maximum(h2, 0.0)

    # Final layer against an 8-lane padded W3 (true logits live in columns [:2]).
    out_ref[...] = jnp.dot(h2, w3_ref[...],
                           preferred_element_type=f32) + b3_ref[...]


def emb_split_head(d1_ids, d2_ids, c_ids, drug_tbl, cell_tbl, cls_params):
    """Pallas call: fused gather + normalize + classifier head, tiled over batch."""
    B = d1_ids.shape[0]
    H = drug_tbl.shape[1]
    w1, b1, w2, b2, w3, b3 = cls_params
    n_out = w3.shape[1]
    out_pad = max(8, _round_up(n_out, 8))   # narrow lane pad (was 128)

    # Batch tile: no zero-row blowup for small B, capped so large B pipelines.
    tile_b = min(MAX_TILE_B, _round_up(B, 8))
    b_pad = _round_up(B, tile_b)
    num_tiles = b_pad // tile_b
    pad = b_pad - B

    def pad_idx(ids):
        ids = ids.astype(jnp.int32)
        if pad:
            ids = jnp.pad(ids, (0, pad))   # padded rows gather row 0; sliced off below
        return ids.reshape(b_pad, 1)

    d1_ids, d2_ids, c_ids = pad_idx(d1_ids), pad_idx(d2_ids), pad_idx(c_ids)

    def pad_rows8(t):
        r = _round_up(t.shape[0], 8)
        return t if r == t.shape[0] else jnp.pad(t, ((0, r - t.shape[0]), (0, 0)))

    drug_p, cell_p = pad_rows8(drug_tbl), pad_rows8(cell_tbl)
    rd, rc = drug_p.shape[0], cell_p.shape[0]

    # Final layer padded only to out_pad (=8) columns; padded columns are zero.
    w3p = jnp.zeros((w3.shape[0], out_pad), jnp.float32).at[:, :n_out].set(w3)
    b3p = jnp.zeros((1, out_pad), jnp.float32).at[:, :n_out].set(b3)

    idx_spec = lambda: pl.BlockSpec((tile_b, 1), lambda i: (i, 0))
    # Weights / embedding tables are resident across all grid iterations
    # (block index 0 always). At large H also use pl.Buffered(1) + bf16 weights.
    resident = lambda a: pl.BlockSpec(a.shape, lambda i: (0, 0))

    flops = 2 * b_pad * ((2 * rd + rc) * H                     # one-hot gathers
                         + 3 * H * 6 * H + 6 * H * 2 * H + 2 * H * out_pad)
    bytes_accessed = 4 * (3 * b_pad                            # int32 indices
                          + b_pad * out_pad                    # output
                          + (rd + rc) * H                      # tables, read once
                          + w1.size + b1.size + w2.size + b2.size
                          + w3p.size + b3p.size)

    # Actual VMEM budget (resident operands + double-buffered per-tile blocks),
    # with generous headroom; matters once H / tile_b grow (v7x: 64 MiB physical).
    resident_bytes = 4 * ((rd + rc) * H + w1.size + b1.size + w2.size + b2.size
                          + w3p.size + b3p.size)
    tile_bytes = 4 * (3 * tile_b + tile_b * out_pad)
    vmem_limit = int(min(64 * 1024 * 1024,
                         max(16 * 1024 * 1024,
                             4 * (2 * resident_bytes + 2 * tile_bytes))))

    out_padded = pl.pallas_call(
        _emb_split_kernel,
        out_shape=jax.ShapeDtypeStruct((b_pad, out_pad), jnp.float32),
        grid_spec=pltpu.PrefetchScalarGridSpec(
            num_scalar_prefetch=0,
            grid=(num_tiles,),
            in_specs=[idx_spec(), idx_spec(), idx_spec(),
                      resident(drug_p), resident(cell_p),
                      resident(w1), resident(b1),
                      resident(w2), resident(b2),
                      resident(w3p), resident(b3p)],
            out_specs=pl.BlockSpec((tile_b, out_pad), lambda i: (i, 0)),
        ),
        compiler_params=pltpu.CompilerParams(
            dimension_semantics=("parallel",),   # batch axis shards across TCs on v7x
            vmem_limit_bytes=vmem_limit),
        cost_estimate=pl.CostEstimate(flops=flops,
                                      transcendentals=3 * b_pad,
                                      bytes_accessed=bytes_accessed),
    )(d1_ids, d2_ids, c_ids, drug_p, cell_p, w1, b1, w2, b2, w3p, b3p)

    return out_padded[:B, :n_out]


def init_params(key, num_drug, num_protein, num_cell, hid):
    ks = jax.random.split(key, 9)
    scale = 0.1
    drug_emb = scale * jax.random.normal(ks[0], (num_drug, hid), jnp.float32)
    protein_emb = scale * jax.random.normal(ks[1], (num_protein, hid), jnp.float32)
    cell_emb = scale * jax.random.normal(ks[2], (num_cell, hid), jnp.float32)
    # classifier: Linear(3H,6H) -> ReLU -> Linear(6H,2H) -> ReLU -> Linear(2H,2)
    w1 = scale * jax.random.normal(ks[3], (3 * hid, 6 * hid), jnp.float32)
    b1 = scale * jax.random.normal(ks[4], (1, 6 * hid), jnp.float32)
    w2 = scale * jax.random.normal(ks[5], (6 * hid, 2 * hid), jnp.float32)
    b2 = scale * jax.random.normal(ks[6], (1, 2 * hid), jnp.float32)
    w3 = scale * jax.random.normal(ks[7], (2 * hid, 2), jnp.float32)
    b3 = scale * jax.random.normal(ks[8], (1, 2), jnp.float32)
    return (drug_emb, protein_emb, cell_emb), (w1, b1, w2, b2, w3, b3)


def emb_split_forward(x_drug, x_protein, x_cell, drug1, drug2, cell,
                      emb_params, cls_params):
    drug_emb, _protein_emb, cell_emb = emb_params
    # TODO(synk): GNNBase message passing omitted (identity over node embeddings);
    # protein embeddings are therefore unused and never gathered.
    # With the identity GNN, hid['drug'][drug1] == drug_emb[x_drug[drug1]], so only
    # the int32 index composition stays in XLA (12 B/row); the H-wide row gathers
    # happen inside the Pallas kernel from VMEM-resident tables.
    d1_ids = jnp.take(x_drug, drug1, axis=0)
    d2_ids = jnp.take(x_drug, drug2, axis=0)
    c_ids = jnp.take(x_cell, cell, axis=0)
    # Dropout layers are identity (eval mode).
    return emb_split_head(d1_ids, d2_ids, c_ids, drug_emb, cell_emb, cls_params)


if __name__ == "__main__":
    # Small, forward-consistent shapes.
    num_drug, num_protein, num_cell, hid = 16, 16, 8, 32
    batch = 8

    key = jax.random.PRNGKey(0)
    k_params, k_d1, k_d2, k_c = jax.random.split(key, 4)
    emb_params, cls_params = init_params(k_params, num_drug, num_protein,
                                         num_cell, hid)

    # Node-id feature vectors (graph.collect('x') style: one id per node).
    x_drug = jnp.arange(num_drug, dtype=jnp.int32)
    x_protein = jnp.arange(num_protein, dtype=jnp.int32)
    x_cell = jnp.arange(num_cell, dtype=jnp.int32)

    drug1 = jax.random.randint(k_d1, (batch,), 0, num_drug, dtype=jnp.int32)
    drug2 = jax.random.randint(k_d2, (batch,), 0, num_drug, dtype=jnp.int32)
    cell = jax.random.randint(k_c, (batch,), 0, num_cell, dtype=jnp.int32)

    logits = emb_split_forward(x_drug, x_protein, x_cell, drug1, drug2, cell,
                               emb_params, cls_params)
    logits = jax.block_until_ready(logits)
    assert logits.shape == (batch, 2) and logits.dtype == jnp.float32

    # Pure-JAX reference check (torch-style normalize + fused classifier).
    def ref_forward():
        drug_emb, _protein_emb, cell_emb = emb_params
        d1 = jnp.take(drug_emb, jnp.take(x_drug, drug1), axis=0)
        d2 = jnp.take(drug_emb, jnp.take(x_drug, drug2), axis=0)
        cc = jnp.take(cell_emb, jnp.take(x_cell, cell), axis=0)
        nrm = lambda x: x / jnp.maximum(
            jnp.sqrt(jnp.sum(x * x, axis=1, keepdims=True)), 1e-12)
        h = jnp.concatenate([nrm(d1), nrm(d2), nrm(cc)], axis=1)
        w1, b1, w2, b2, w3, b3 = cls_params
        h = jnp.maximum(h @ w1 + b1, 0.0)
        h = jnp.maximum(h @ w2 + b2, 0.0)
        return h @ w3 + b3

    ref = ref_forward()
    # 2e-3 tolerance covers TPU default (bf16-operand) matmul precision paths.
    assert jnp.allclose(logits, ref, atol=2e-3, rtol=2e-3), (logits, ref)

    print("KERNEL_OK")
</pallas_src>

<mosaic_0001>
module attributes {stable_mosaic.version = 11 : i64} {
  func.func @_emb_split_kernel(%arg0: i32, %arg1: memref<8x1xi32, #tpu.memory_space<vmem>>, %arg2: memref<8x1xi32, #tpu.memory_space<vmem>>, %arg3: memref<8x1xi32, #tpu.memory_space<vmem>>, %arg4: memref<16x32xf32, #tpu.memory_space<vmem>>, %arg5: memref<8x32xf32, #tpu.memory_space<vmem>>, %arg6: memref<96x192xf32, #tpu.memory_space<vmem>>, %arg7: memref<1x192xf32, #tpu.memory_space<vmem>>, %arg8: memref<192x64xf32, #tpu.memory_space<vmem>>, %arg9: memref<1x64xf32, #tpu.memory_space<vmem>>, %arg10: memref<64x8xf32, #tpu.memory_space<vmem>>, %arg11: memref<1x8xf32, #tpu.memory_space<vmem>>, %arg12: memref<8x8xf32, #tpu.memory_space<vmem>>) attributes {dimension_semantics = [#tpu.dimension_semantics<parallel>], iteration_bounds = array<i64: 1>, scalar_prefetch = 0 : i64, scratch_operands = 0 : i64, tpu.core_type = #tpu.core_type<tc>, window_params = [{transform_indices = @transform_0, window_bounds = array<i64: 8, 1>}, {transform_indices = @transform_1, window_bounds = array<i64: 8, 1>}, {transform_indices = @transform_2, window_bounds = array<i64: 8, 1>}, {pipeline_mode = #tpu.pipeline_mode<synchronous>, transform_indices = @transform_3, window_bounds = array<i64: 16, 32>}, {pipeline_mode = #tpu.pipeline_mode<synchronous>, transform_indices = @transform_4, window_bounds = array<i64: 8, 32>}, {pipeline_mode = #tpu.pipeline_mode<synchronous>, transform_indices = @transform_5, window_bounds = array<i64: 96, 192>}, {pipeline_mode = #tpu.pipeline_mode<synchronous>, transform_indices = @transform_6, window_bounds = array<i64: 1, 192>}, {pipeline_mode = #tpu.pipeline_mode<synchronous>, transform_indices = @transform_7, window_bounds = array<i64: 192, 64>}, {pipeline_mode = #tpu.pipeline_mode<synchronous>, transform_indices = @transform_8, window_bounds = array<i64: 1, 64>}, {pipeline_mode = #tpu.pipeline_mode<synchronous>, transform_indices = @transform_9, window_bounds = array<i64: 64, 8>}, {pipeline_mode = #tpu.pipeline_mode<synchronous>, transform_indices = @transform_10, window_bounds = array<i64: 1, 8>}, {transform_indices = @transform_11, window_bounds = array<i64: 8, 8>}]} {
    %0 = tpu.iota {dimensions = array<i32: 1>} : vector<8x16xi32>
    %c0 = arith.constant 0 : index
    %c0_0 = arith.constant 0 : index
    %1 = vector.load %arg1[%c0, %c0_0] : memref<8x1xi32, #tpu.memory_space<vmem>>, vector<8x1xi32>
    %2 = vector.broadcast %1 : vector<8x1xi32> to vector<8x16xi32>
    %3 = arith.cmpi eq, %0, %2 : vector<8x16xi32>
    %4 = arith.extui %3 : vector<8x16xi1> to vector<8x16xi32>
    %5 = arith.sitofp %4 : vector<8x16xi32> to vector<8x16xf32>
    %c0_1 = arith.constant 0 : index
    %c0_2 = arith.constant 0 : index
    %6 = vector.load %arg4[%c0_1, %c0_2] : memref<16x32xf32, #tpu.memory_space<vmem>>, vector<16x32xf32>
    %cst = arith.constant dense<0.000000e+00> : vector<8x32xf32>
    %7 = tpu.matmul %5, %6, %cst {dimension_numbers = #tpu.dot_dimension_numbers<[1], [0], [0], [1], [0, 0, 1, 1], [], []>} : vector<8x16xf32>, vector<16x32xf32>, vector<8x32xf32> -> vector<8x32xf32>
    %8 = arith.mulf %7, %7 : vector<8x32xf32>
    %cst_3 = arith.constant dense<0.000000e+00> : vector<8xf32>
    %9 = vector.multi_reduction <add>, %8, %cst_3 [1] : vector<8x32xf32> to vector<8xf32>
    %10 = vector.shape_cast %9 : vector<8xf32> to vector<8x1xf32>
    %11 = math.sqrt %10 : vector<8x1xf32>
    %cst_4 = arith.constant 9.99999996E-13 : f32
    %12 = vector.broadcast %cst_4 : f32 to vector<8x1xf32>
    %13 = arith.maximumf %11, %12 : vector<8x1xf32>
    %14 = vector.broadcast %13 : vector<8x1xf32> to vector<8x32xf32>
    %15 = arith.divf %7, %14 : vector<8x32xf32>
    %16 = tpu.iota {dimensions = array<i32: 1>} : vector<8x16xi32>
    %c0_5 = arith.constant 0 : index
    %c0_6 = arith.constant 0 : index
    %17 = vector.load %arg2[%c0_5, %c0_6] : memref<8x1xi32, #tpu.memory_space<vmem>>, vector<8x1xi32>
    %18 = vector.broadcast %17 : vector<8x1xi32> to vector<8x16xi32>
    %19 = arith.cmpi eq, %16, %18 : vector<8x16xi32>
    %20 = arith.extui %19 : vector<8x16xi1> to vector<8x16xi32>
    %21 = arith.sitofp %20 : vector<8x16xi32> to vector<8x16xf32>
    %c0_7 = arith.constant 0 : index
    %c0_8 = arith.constant 0 : index
    %22 = vector.load %arg4[%c0_7, %c0_8] : memref<16x32xf32, #tpu.memory_space<vmem>>, vector<16x32xf32>
    %cst_9 = arith.constant dense<0.000000e+00> : vector<8x32xf32>
    %23 = tpu.matmul %21, %22, %cst_9 {dimension_numbers = #tpu.dot_dimension_numbers<[1], [0], [0], [1], [0, 0, 1, 1], [], []>} : vector<8x16xf32>, vector<16x32xf32>, vector<8x32xf32> -> vector<8x32xf32>
    %24 = arith.mulf %23, %23 : vector<8x32xf32>
    %cst_10 = arith.constant dense<0.000000e+00> : vector<8xf32>
    %25 = vector.multi_reduction <add>, %24, %cst_10 [1] : vector<8x32xf32> to vector<8xf32>
    %26 = vector.shape_cast %25 : vector<8xf32> to vector<8x1xf32>
    %27 = math.sqrt %26 : vector<8x1xf32>
    %cst_11 = arith.constant 9.99999996E-13 : f32
    %28 = vector.broadcast %cst_11 : f32 to vector<8x1xf32>
    %29 = arith.maximumf %27, %28 : vector<8x1xf32>
    %30 = vector.broadcast %29 : vector<8x1xf32> to vector<8x32xf32>
    %31 = arith.divf %23, %30 : vector<8x32xf32>
    %32 = tpu.iota {dimensions = array<i32: 1>} : vector<8x8xi32>
    %c0_12 = arith.constant 0 : index
    %c0_13 = arith.constant 0 : index
    %33 = vector.load %arg3[%c0_12, %c0_13] : memref<8x1xi32, #tpu.memory_space<vmem>>, vector<8x1xi32>
    %34 = vector.broadcast %33 : vector<8x1xi32> to vector<8x8xi32>
    %35 = arith.cmpi eq, %32, %34 : vector<8x8xi32>
    %36 = arith.extui %35 : vector<8x8xi1> to vector<8x8xi32>
    %37 = arith.sitofp %36 : vector<8x8xi32> to vector<8x8xf32>
    %c0_14 = arith.constant 0 : index
    %c0_15 = arith.constant 0 : index
    %38 = vector.load %arg5[%c0_14, %c0_15] : memref<8x32xf32, #tpu.memory_space<vmem>>, vector<8x32xf32>
    %cst_16 = arith.constant dense<0.000000e+00> : vector<8x32xf32>
    %39 = tpu.matmul %37, %38, %cst_16 {dimension_numbers = #tpu.dot_dimension_numbers<[1], [0], [0], [1], [0, 0, 1, 1], [], []>} : vector<8x8xf32>, vector<8x32xf32>, vector<8x32xf32> -> vector<8x32xf32>
    %40 = arith.mulf %39, %39 : vector<8x32xf32>
    %cst_17 = arith.constant dense<0.000000e+00> : vector<8xf32>
    %41 = vector.multi_reduction <add>, %40, %cst_17 [1] : vector<8x32xf32> to vector<8xf32>
    %42 = vector.shape_cast %41 : vector<8xf32> to vector<8x1xf32>
    %43 = math.sqrt %42 : vector<8x1xf32>
    %cst_18 = arith.constant 9.99999996E-13 : f32
    %44 = vector.broadcast %cst_18 : f32 to vector<8x1xf32>
    %45 = arith.maximumf %43, %44 : vector<8x1xf32>
    %46 = vector.broadcast %45 : vector<8x1xf32> to vector<8x32xf32>
    %47 = arith.divf %39, %46 : vector<8x32xf32>
    %48 = tpu.concatenate %15, %31, %47 in 1 : vector<8x32xf32>, vector<8x32xf32>, vector<8x32xf32> -> vector<8x96xf32>
    %c0_19 = arith.constant 0 : index
    %c0_20 = arith.constant 0 : index
    %49 = vector.load %arg6[%c0_19, %c0_20] : memref<96x192xf32, #tpu.memory_space<vmem>>, vector<96x192xf32>
    %cst_21 = arith.constant dense<0.000000e+00> : vector<8x192xf32>
    %50 = tpu.matmul %48, %49, %cst_21 {dimension_numbers = #tpu.dot_dimension_numbers<[1], [0], [0], [1], [0, 0, 1, 1], [], []>} : vector<8x96xf32>, vector<96x192xf32>, vector<8x192xf32> -> vector<8x192xf32>
    %c0_22 = arith.constant 0 : index
    %c0_23 = arith.constant 0 : index
    %51 = vector.load %arg7[%c0_22, %c0_23] : memref<1x192xf32, #tpu.memory_space<vmem>>, vector<1x192xf32>
    %52 = vector.broadcast %51 : vector<1x192xf32> to vector<8x192xf32>
    %53 = arith.addf %50, %52 : vector<8x192xf32>
    %cst_24 = arith.constant 0.000000e+00 : f32
    %54 = vector.broadcast %cst_24 : f32 to vector<8x192xf32>
    %55 = arith.maximumf %53, %54 : vector<8x192xf32>
    %c0_25 = arith.constant 0 : index
    %c0_26 = arith.constant 0 : index
    %56 = vector.load %arg8[%c0_25, %c0_26] : memref<192x64xf32, #tpu.memory_space<vmem>>, vector<192x64xf32>
    %cst_27 = arith.constant dense<0.000000e+00> : vector<8x64xf32>
    %57 = tpu.matmul %55, %56, %cst_27 {dimension_numbers = #tpu.dot_dimension_numbers<[1], [0], [0], [1], [0, 0, 1, 1], [], []>} : vector<8x192xf32>, vector<192x64xf32>, vector<8x64xf32> -> vector<8x64xf32>
    %c0_28 = arith.constant 0 : index
    %c0_29 = arith.constant 0 : index
    %58 = vector.load %arg9[%c0_28, %c0_29] : memref<1x64xf32, #tpu.memory_space<vmem>>, vector<1x64xf32>
    %59 = vector.broadcast %58 : vector<1x64xf32> to vector<8x64xf32>
    %60 = arith.addf %57, %59 : vector<8x64xf32>
    %cst_30 = arith.constant 0.000000e+00 : f32
    %61 = vector.broadcast %cst_30 : f32 to vector<8x64xf32>
    %62 = arith.maximumf %60, %61 : vector<8x64xf32>
    %c0_31 = arith.constant 0 : index
    %c0_32 = arith.constant 0 : index
    %63 = vector.load %arg10[%c0_31, %c0_32] : memref<64x8xf32, #tpu.memory_space<vmem>>, vector<64x8xf32>
    %cst_33 = arith.constant dense<0.000000e+00> : vector<8x8xf32>
    %64 = tpu.matmul %62, %63, %cst_33 {dimension_numbers = #tpu.dot_dimension_numbers<[1], [0], [0], [1], [0, 0, 1, 1], [], []>} : vector<8x64xf32>, vector<64x8xf32>, vector<8x8xf32> -> vector<8x8xf32>
    %c0_34 = arith.constant 0 : index
    %c0_35 = arith.constant 0 : index
    %65 = vector.load %arg11[%c0_34, %c0_35] : memref<1x8xf32, #tpu.memory_space<vmem>>, vector<1x8xf32>
    %66 = vector.broadcast %65 : vector<1x8xf32> to vector<8x8xf32>
    %67 = arith.addf %64, %66 : vector<8x8xf32>
    %c0_36 = arith.constant 0 : index
    %c0_37 = arith.constant 0 : index
    %68 = vector.load %arg12[%c0_36, %c0_37] : memref<8x8xf32, #tpu.memory_space<vmem>>, vector<8x8xf32>
    tpu.vector_store %arg12[%c0_36, %c0_37], %67 {strides = array<i32>} : memref<8x8xf32, #tpu.memory_space<vmem>>, vector<8x8xf32>,
    return
  }
  func.func @transform_0(%arg0: i32) -> (i32, i32) {
    %c0_i32 = arith.constant 0 : i32
    %c0_i32_0 = arith.constant 0 : i32
    return %arg0, %c0_i32 : i32, i32
  }
  func.func @transform_1(%arg0: i32) -> (i32, i32) {
    %c0_i32 = arith.constant 0 : i32
    %c0_i32_0 = arith.constant 0 : i32
    return %arg0, %c0_i32 : i32, i32
  }
  func.func @transform_2(%arg0: i32) -> (i32, i32) {
    %c0_i32 = arith.constant 0 : i32
    %c0_i32_0 = arith.constant 0 : i32
    return %arg0, %c0_i32 : i32, i32
  }
  func.func @transform_3(%arg0: i32) -> (i32, i32) {
    %c0_i32 = arith.constant 0 : i32
    %c0_i32_0 = arith.constant 0 : i32
    %c0_i32_1 = arith.constant 0 : i32
    return %c0_i32, %c0_i32_0 : i32, i32
  }
  func.func @transform_4(%arg0: i32) -> (i32, i32) {
    %c0_i32 = arith.constant 0 : i32
    %c0_i32_0 = arith.constant 0 : i32
    %c0_i32_1 = arith.constant 0 : i32
    return %c0_i32, %c0_i32_0 : i32, i32
  }
  func.func @transform_5(%arg0: i32) -> (i32, i32) {
    %c0_i32 = arith.constant 0 : i32
    %c0_i32_0 = arith.constant 0 : i32
    %c0_i32_1 = arith.constant 0 : i32
    return %c0_i32, %c0_i32_0 : i32, i32
  }
  func.func @transform_6(%arg0: i32) -> (i32, i32) {
    %c0_i32 = arith.constant 0 : i32
    %c0_i32_0 = arith.constant 0 : i32
    %c0_i32_1 = arith.constant 0 : i32
    return %c0_i32, %c0_i32_0 : i32, i32
  }
  func.func @transform_7(%arg0: i32) -> (i32, i32) {
    %c0_i32 = arith.constant 0 : i32
    %c0_i32_0 = arith.constant 0 : i32
    %c0_i32_1 = arith.constant 0 : i32
    return %c0_i32, %c0_i32_0 : i32, i32
  }
  func.func @transform_8(%arg0: i32) -> (i32, i32) {
    %c0_i32 = arith.constant 0 : i32
    %c0_i32_0 = arith.constant 0 : i32
    %c0_i32_1 = arith.constant 0 : i32
    return %c0_i32, %c0_i32_0 : i32, i32
  }
  func.func @transform_9(%arg0: i32) -> (i32, i32) {
    %c0_i32 = arith.constant 0 : i32
    %c0_i32_0 = arith.constant 0 : i32
    %c0_i32_1 = arith.constant 0 : i32
    return %c0_i32, %c0_i32_0 : i32, i32
  }
  func.func @transform_10(%arg0: i32) -> (i32, i32) {
    %c0_i32 = arith.constant 0 : i32
    %c0_i32_0 = arith.constant 0 : i32
    %c0_i32_1 = arith.constant 0 : i32
    return %c0_i32, %c0_i32_0 : i32, i32
  }
  func.func @transform_11(%arg0: i32) -> (i32, i32) {
    %c0_i32 = arith.constant 0 : i32
    %c0_i32_0 = arith.constant 0 : i32
    return %arg0, %c0_i32 : i32, i32
  }
}

</mosaic_0001>

<llo_original>
// kernel: tpu_custom_call.1
$region0: #{tpu_custom_call.1}
  #allocation0 [shape = 'u32[]', space=smem, size = 0x4, offset = 0x4, fixed_abs, tag = 'smem constant byte address 0x4 - core index']
  #allocation1 [shape = 'u32[144,128]{1,0:T(1,128)}', space=vmem, size = 0x12000, scoped, tag = 'internal scratch']
  %s0 = inlined_call_operand.vmem [shape: s32[8,1], index: 0, kind: input, shape index: {}]
  %s1 = inlined_call_operand.vmem [shape: s32[8,1], index: 1, kind: input, shape index: {}]
  %s2 = inlined_call_operand.vmem [shape: s32[8,1], index: 2, kind: input, shape index: {}]
  %s3 = inlined_call_operand.vmem [shape: f32[16,32], index: 3, kind: input, shape index: {}]
  %s4 = inlined_call_operand.vmem [shape: f32[8,32], index: 4, kind: input, shape index: {}]
  %s5 = inlined_call_operand.vmem [shape: f32[96,192], index: 5, kind: input, shape index: {}]
  %s6 = inlined_call_operand.vmem [shape: f32[1,192], index: 6, kind: input, shape index: {}]
  %s7 = inlined_call_operand.vmem [shape: f32[192,64], index: 7, kind: input, shape index: {}]
  %s8 = inlined_call_operand.vmem [shape: f32[1,64], index: 8, kind: input, shape index: {}]
  %s9 = inlined_call_operand.vmem [shape: f32[64,8], index: 9, kind: input, shape index: {}]
  %s10 = inlined_call_operand.vmem [shape: f32[1,8], index: 10, kind: input, shape index: {}]
  %s11 = inlined_call_operand.hbm [shape: f32[8,8], index: 11, kind: output, shape index: {}]
  %s12 = sld [smem:[#allocation0]]
  $region54: #{tpu_custom_call.1} parent=0
    _
  %s14 = ssub.s32 1, %s12
  %s15 = scalar_select 0, %s14, %s12
  $region1: #{tpu_custom_call.1} parent=0
    #allocation2 [shape = 'u8[4096]{0}', space=vmem, size = 0x1000, scoped, tag = 'output window, operand 0, single buffered']
    #allocation3 [shape = 's32[1]{0}', space=sflag, size = 0x4, scoped, tag = 'scoped memory for tpu_custom_call.1']
    %16 = vsyncpa [#allocation3], 0
    // Predicated region
    $region2: #{tpu_custom_call.1} parent=1 // pred_check
      _
    $region3: #{tpu_custom_call.1} parent=1 // pred_check_branch
      %18 = sbr.rel (0) target = $region5
    $region4: #{tpu_custom_call.1} parent=1 // pred_region
      _
    $region5: #{tpu_custom_call.1} parent=1 // pred_fallthru
      _
    // Predicated region
    $region6: #{tpu_custom_call.1} parent=1 // pred_check
      _
    $region7: #{tpu_custom_call.1} parent=1 // pred_check_branch
      %20 = sbr.rel (0) target = $region9
    $region8: #{tpu_custom_call.1} parent=1 // pred_region
      _
    $region9: #{tpu_custom_call.1} parent=1 // pred_fallthru
      _
    // Predicated region
    $region10: #{tpu_custom_call.1} parent=1 // pred_check
      _
    $region11: #{tpu_custom_call.1} parent=1 // pred_check_branch
      %22 = sbr.rel (0) target = $region13
    $region12: #{tpu_custom_call.1} parent=1 // pred_region
      _
    $region13: #{tpu_custom_call.1} parent=1 // pred_fallthru
      _
    // Predicated region
    $region14: #{tpu_custom_call.1} parent=1 // pred_check
      _
    $region15: #{tpu_custom_call.1} parent=1 // pred_check_branch
      %24 = sbr.rel (0) target = $region17
    $region16: #{tpu_custom_call.1} parent=1 // pred_region
      _
    $region17: #{tpu_custom_call.1} parent=1 // pred_fallthru
      _
    // Predicated region
    $region18: #{tpu_custom_call.1} parent=1 // pred_check
      _
    $region19: #{tpu_custom_call.1} parent=1 // pred_check_branch
      %26 = sbr.rel (0) target = $region21
    $region20: #{tpu_custom_call.1} parent=1 // pred_region
      _
    $region21: #{tpu_custom_call.1} parent=1 // pred_fallthru
      _
    // Predicated region
    $region22: #{tpu_custom_call.1} parent=1 // pred_check
      _
    $region23: #{tpu_custom_call.1} parent=1 // pred_check_branch
      %28 = sbr.rel (0) target = $region25
    $region24: #{tpu_custom_call.1} parent=1 // pred_region
      _
    $region25: #{tpu_custom_call.1} parent=1 // pred_fallthru
      _
    // Predicated region
    $region26: #{tpu_custom_call.1} parent=1 // pred_check
      _
    $region27: #{tpu_custom_call.1} parent=1 // pred_check_branch
      %30 = sbr.rel (0) target = $region29
    $region28: #{tpu_custom_call.1} parent=1 // pred_region
      _
    $region29: #{tpu_custom_call.1} parent=1 // pred_fallthru
      _
    // Predicated region
    $region30: #{tpu_custom_call.1} parent=1 // pred_check
      _
    $region31: #{tpu_custom_call.1} parent=1 // pred_check_branch
      %32 = sbr.rel (0) target = $region33
    $region32: #{tpu_custom_call.1} parent=1 // pred_region
      _
    $region33: #{tpu_custom_call.1} parent=1 // pred_fallthru
      _
    // Predicated region
    $region34: #{tpu_custom_call.1} parent=1 // pred_check
      _
    $region35: #{tpu_custom_call.1} parent=1 // pred_check_branch
      %34 = sbr.rel (0) target = $region37
    $region36: #{tpu_custom_call.1} parent=1 // pred_region
      _
    $region37: #{tpu_custom_call.1} parent=1 // pred_fallthru
      _
    // Predicated region
    $region38: #{tpu_custom_call.1} parent=1 // pred_check
      _
    $region39: #{tpu_custom_call.1} parent=1 // pred_check_branch
      %36 = sbr.rel (0) target = $region41
    $region40: #{tpu_custom_call.1} parent=1 // pred_region
      _
    $region41: #{tpu_custom_call.1} parent=1 // pred_fallthru
      _
    // Predicated region
    $region42: #{tpu_custom_call.1} parent=1 // pred_check
      _
    $region43: #{tpu_custom_call.1} parent=1 // pred_check_branch
      %38 = sbr.rel (0) target = $region45
    $region44: #{tpu_custom_call.1} parent=1 // pred_region
      _
    $region45: #{tpu_custom_call.1} parent=1 // pred_fallthru
      _
    %v39 = vlaneseq
    %v40 = vand.u32 %v39, 127
    %v41 = vld [vmem:[%s0] sm:$0xff]
    %42 = vset.pattern.permute.xlu0 0
    %43 = vperm.xlu0 %42, %v41
    %v44 = vpop.permute.xlu0 %43
    %vm45 = vcmp.eq.s32.totalorder %v40, %v44
    %v46 = vsel %vm45, 1, 0
    %v47 = vcvt.s32.f32 %v46
    %v48 = vld [vmem:[%s3] sm:$0xff]
    %v49 = vld [vmem:[%s3 + $0x8] sm:$0xff]
    %vm50 = vcmask 130048
    %v52 = vsel %vm50, %v47, 0
    %54 = vmatprep.subr.mxu0 0.0
    %55 = vmatpush1.msra.mxu0 %v48
    %56 = vmatprep.subr.mxu0 0.0
    %57 = vmatpush1.msra.mxu0 %v49
    %58 = vmatprep.subr.mxu0 0.0
    %59 = vmatpush1.msra.mxu0 0.0
    %60 = vmatprep.subr.mxu0 0.0
    %61 = vmatpush1.msra.mxu0 0.0
    %62 = vmatprep.subr.mxu0 0.0
    %63 = vmatpush1.msra.mxu0 0.0
    %64 = vmatprep.subr.mxu0 0.0
    %65 = vmatpush1.msra.mxu0 0.0
    %66 = vmatprep.subr.mxu0 0.0
    %67 = vmatpush1.msra.mxu0 0.0
    %68 = vmatprep.subr.mxu0 0.0
    %69 = vmatpush1.msra.mxu0 0.0
    %70 = vmatprep.subr.mxu0 0.0
    %71 = vmatpush1.msra.mxu0 0.0
    %72 = vmatprep.subr.mxu0 0.0
    %73 = vmatpush1.msra.mxu0 0.0
    %74 = vmatprep.subr.mxu0 0.0
    %75 = vmatpush1.msra.mxu0 0.0
    %76 = vmatprep.subr.mxu0 0.0
    %77 = vmatpush1.msra.mxu0 0.0
    %78 = vmatprep.subr.mxu0 0.0
    %79 = vmatpush1.msra.mxu0 0.0
    %80 = vmatprep.subr.mxu0 0.0
    %81 = vmatpush1.msra.mxu0 0.0
    %82 = vmatprep.subr.mxu0 0.0
    %83 = vmatpush1.msra.mxu0 0.0
    %84 = vmatprep.subr.mxu0 0.0
    %85 = vmatpush1.msra.mxu0 0.0
    %86 = vmatprep.subr.mxu0 0.0
    %87 = vmatpush1.msra.mxu0 0.0
    %88 = vmatprep.subr.mxu0 0.0
    %89 = vmatpush1.msra.mxu0 0.0
    %90 = vmatprep.subr.mxu0 0.0
    %91 = vmatpush1.msra.mxu0 0.0
    %92 = vmatprep.subr.mxu0 0.0
    %93 = vmatpush1.msra.mxu0 0.0
    %94 = vmatprep.subr.mxu0 0.0
    %95 = vmatpush1.msra.mxu0 0.0
    %96 = vmatprep.subr.mxu0 0.0
    %97 = vmatpush1.msra.mxu0 0.0
    %98 = vmatprep.subr.mxu0 0.0
    %99 = vmatpush1.msra.mxu0 0.0
    %100 = vmatprep.subr.mxu0 0.0
    %101 = vmatpush1.msra.mxu0 0.0
    %102 = vmatprep.subr.mxu0 0.0
    %103 = vmatpush1.msra.mxu0 0.0
    %104 = vmatprep.subr.mxu0 0.0
    %105 = vmatpush1.msra.mxu0 0.0
    %106 = vmatprep.subr.mxu0 0.0
    %107 = vmatpush1.msra.mxu0 0.0
    %108 = vmatprep.subr.mxu0 0.0
    %109 = vmatpush1.msra.mxu0 0.0
    %110 = vmatprep.subr.mxu0 0.0
    %111 = vmatpush1.msra.mxu0 0.0
    %112 = vmatprep.subr.mxu0 0.0
    %113 = vmatpush1.msra.mxu0 0.0
    %114 = vmatprep.subr.mxu0 0.0
    %115 = vmatpush1.msra.mxu0 0.0
    %116 = vmatprep.subr.mxu0 0.0
    %117 = vmatpush1.msra.mxu0 0.0
    %118 = vmatprep.mubr.f32.mxu0 0.0
    %119 = vmatmul.mubr.f32.gmra.mrb[0].mxu0 %v52
    %v120 = vpop.f32.mrb[0].mxu0
    %v121 = vadd.f32 0.0, %v120
    %v122 = vpop.f32.mrb[0].mxu0
    %123 = vdwg.mxu0
    %v124 = vmul.f32 %v121, %v121
    %vm125 = vcmask 261120
    %v126 = vsel %vm125, %v124, 0.0
    %127 = vadd.xlane.f32.xlu0 %v126
    %v128 = vpop.xlane.xlu0 %127
    %v129 = vrsqrt.pop %v128
    %v130 = vmul.f32 %v128, %v129
    %vm131 = vcmp.eq.f32.partialorder %v128, inf
    %v132 = vsel %vm131, %v128, %v130
    %vm133 = vcmp.eq.f32.partialorder %v128, 0.0
    %v134 = vand.u32 %v128, 2147483648
    %v135 = vsel %vm133, %v134, %v132
    %v136 = vmax.f32 %v135, 1e-12
    %v137 = vrcp.pop %v136
    %v138 = vmul.f32 %v121, %v137
    %v139 = vld [vmem:[%s1] sm:$0xff]
    %140 = vset.pattern.permute.xlu0 0
    %141 = vperm.xlu0 %140, %v139
    %v142 = vpop.permute.xlu0 %141
    %vm143 = vcmp.eq.s32.totalorder %v40, %v142
    %v144 = vsel %vm143, 1, 0
    %v145 = vcvt.s32.f32 %v144
    %v147 = vsel %vm50, %v145, 0
    %149 = vmatprep.subr.mxu0 0.0
    %150 = vmatpush1.msra.mxu0 %v48
    %151 = vmatprep.subr.mxu0 0.0
    %152 = vmatpush1.msra.mxu0 %v49
    %153 = vmatprep.subr.mxu0 0.0
    %154 = vmatpush1.msra.mxu0 0.0
    %155 = vmatprep.subr.mxu0 0.0
    %156 = vmatpush1.msra.mxu0 0.0
    %157 = vmatprep.subr.mxu0 0.0
    %158 = vmatpush1.msra.mxu0 0.0
    %159 = vmatprep.subr.mxu0 0.0
    %160 = vmatpush1.msra.mxu0 0.0
    %161 = vmatprep.subr.mxu0 0.0
    %162 = vmatpush1.msra.mxu0 0.0
    %163 = vmatprep.subr.mxu0 0.0
    %164 = vmatpush1.msra.mxu0 0.0
    %165 = vmatprep.subr.mxu0 0.0
    %166 = vmatpush1.msra.mxu0 0.0
    %167 = vmatprep.subr.mxu0 0.0
    %168 = vmatpush1.msra.mxu0 0.0
    %169 = vmatprep.subr.mxu0 0.0
    %170 = vmatpush1.msra.mxu0 0.0
    %171 = vmatprep.subr.mxu0 0.0
    %172 = vmatpush1.msra.mxu0 0.0
    %173 = vmatprep.subr.mxu0 0.0
    %174 = vmatpush1.msra.mxu0 0.0
    %175 = vmatprep.subr.mxu0 0.0
    %176 = vmatpush1.msra.mxu0 0.0
    %177 = vmatprep.subr.mxu0 0.0
    %178 = vmatpush1.msra.mxu0 0.0
    %179 = vmatprep.subr.mxu0 0.0
    %180 = vmatpush1.msra.mxu0 0.0
    %181 = vmatprep.subr.mxu0 0.0
    %182 = vmatpush1.msra.mxu0 0.0
    %183 = vmatprep.subr.mxu0 0.0
    %184 = vmatpush1.msra.mxu0 0.0
    %185 = vmatprep.subr.mxu0 0.0
    %186 = vmatpush1.msra.mxu0 0.0
    %187 = vmatprep.subr.mxu0 0.0
    %188 = vmatpush1.msra.mxu0 0.0
    %189 = vmatprep.subr.mxu0 0.0
    %190 = vmatpush1.msra.mxu0 0.0
    %191 = vmatprep.subr.mxu0 0.0
    %192 = vmatpush1.msra.mxu0 0.0
    %193 = vmatprep.subr.mxu0 0.0
    %194 = vmatpush1.msra.mxu0 0.0
    %195 = vmatprep.subr.mxu0 0.0
    %196 = vmatpush1.msra.mxu0 0.0
    %197 = vmatprep.subr.mxu0 0.0
    %198 = vmatpush1.msra.mxu0 0.0
    %199 = vmatprep.subr.mxu0 0.0
    %200 = vmatpush1.msra.mxu0 0.0
    %201 = vmatprep.subr.mxu0 0.0
    %202 = vmatpush1.msra.mxu0 0.0
    %203 = vmatprep.subr.mxu0 0.0
    %204 = vmatpush1.msra.mxu0 0.0
    %205 = vmatprep.subr.mxu0 0.0
    %206 = vmatpush1.msra.mxu0 0.0
    %207 = vmatprep.subr.mxu0 0.0
    %208 = vmatpush1.msra.mxu0 0.0
    %209 = vmatprep.subr.mxu0 0.0
    %210 = vmatpush1.msra.mxu0 0.0
    %211 = vmatprep.subr.mxu0 0.0
    %212 = vmatpush1.msra.mxu0 0.0
    %213 = vmatprep.mubr.f32.mxu0 0.0
    %214 = vmatmul.mubr.f32.gmra.mrb[0].mxu0 %v147
    %v215 = vpop.f32.mrb[0].mxu0
    %v216 = vadd.f32 0.0, %v215
    %v217 = vpop.f32.mrb[0].mxu0
    %218 = vdwg.mxu0
    %v219 = vmul.f32 %v216, %v216
    %v220 = vsel %vm125, %v219, 0.0
    %221 = vadd.xlane.f32.xlu0 %v220
    %v222 = vpop.xlane.xlu0 %221
    %v223 = vrsqrt.pop %v222
    %v224 = vmul.f32 %v222, %v223
    %vm225 = vcmp.eq.f32.partialorder %v222, inf
    %v226 = vsel %vm225, %v222, %v224
    %vm227 = vcmp.eq.f32.partialorder %v222, 0.0
    %v228 = vand.u32 %v222, 2147483648
    %v229 = vsel %vm227, %v228, %v226
    %v230 = vmax.f32 %v229, 1e-12
    %v231 = vrcp.pop %v230
    %v232 = vmul.f32 %v216, %v231
    %v233 = vld [vmem:[%s2] sm:$0xff]
    %234 = vset.pattern.permute.xlu0 0
    %235 = vperm.xlu0 %234, %v233
    %v236 = vpop.permute.xlu0 %235
    %vm237 = vcmp.eq.s32.totalorder %v40, %v236
    %v238 = vsel %vm237, 1, 0
    %v239 = vcvt.s32.f32 %v238
    %v240 = vld [vmem:[%s4] sm:$0xff]
    %vm241 = vcmask 64512
    %v243 = vsel %vm241, %v239, 0
    %245 = vmatprep.subr.mxu0 0.0
    %246 = vmatpush1.msra.mxu0 %v240
    %247 = vmatprep.subr.mxu0 0.0
    %248 = vmatpush1.msra.mxu0 0.0
    %249 = vmatprep.subr.mxu0 0.0
    %250 = vmatpush1.msra.mxu0 0.0
    %251 = vmatprep.subr.mxu0 0.0
    %252 = vmatpush1.msra.mxu0 0.0
    %253 = vmatprep.subr.mxu0 0.0
    %254 = vmatpush1.msra.mxu0 0.0
    %255 = vmatprep.subr.mxu0 0.0
    %256 = vmatpush1.msra.mxu0 0.0
    %257 = vmatprep.subr.mxu0 0.0
    %258 = vmatpush1.msra.mxu0 0.0
    %259 = vmatprep.subr.mxu0 0.0
    %260 = vmatpush1.msra.mxu0 0.0
    %261 = vmatprep.subr.mxu0 0.0
    %262 = vmatpush1.msra.mxu0 0.0
    %263 = vmatprep.subr.mxu0 0.0
    %264 = vmatpush1.msra.mxu0 0.0
    %265 = vmatprep.subr.mxu0 0.0
    %266 = vmatpush1.msra.mxu0 0.0
    %267 = vmatprep.subr.mxu0 0.0
    %268 = vmatpush1.msra.mxu0 0.0
    %269 = vmatprep.subr.mxu0 0.0
    %270 = vmatpush1.msra.mxu0 0.0
    %271 = vmatprep.subr.mxu0 0.0
    %272 = vmatpush1.msra.mxu0 0.0
    %273 = vmatprep.subr.mxu0 0.0
    %274 = vmatpush1.msra.mxu0 0.0
    %275 = vmatprep.subr.mxu0 0.0
    %276 = vmatpush1.msra.mxu0 0.0
    %277 = vmatprep.subr.mxu0 0.0
    %278 = vmatpush1.msra.mxu0 0.0
    %279 = vmatprep.subr.mxu0 0.0
    %280 = vmatpush1.msra.mxu0 0.0
    %281 = vmatprep.subr.mxu0 0.0
    %282 = vmatpush1.msra.mxu0 0.0
    %283 = vmatprep.subr.mxu0 0.0
    %284 = vmatpush1.msra.mxu0 0.0
    %285 = vmatprep.subr.mxu0 0.0
    %286 = vmatpush1.msra.mxu0 0.0
    %287 = vmatprep.subr.mxu0 0.0
    %288 = vmatpush1.msra.mxu0 0.0
    %289 = vmatprep.subr.mxu0 0.0
    %290 = vmatpush1.msra.mxu0 0.0
    %291 = vmatprep.subr.mxu0 0.0
    %292 = vmatpush1.msra.mxu0 0.0
    %293 = vmatprep.subr.mxu0 0.0
    %294 = vmatpush1.msra.mxu0 0.0
    %295 = vmatprep.subr.mxu0 0.0
    %296 = vmatpush1.msra.mxu0 0.0
    %297 = vmatprep.subr.mxu0 0.0
    %298 = vmatpush1.msra.mxu0 0.0
    %299 = vmatprep.subr.mxu0 0.0
    %300 = vmatpush1.msra.mxu0 0.0
    %301 = vmatprep.subr.mxu0 0.0
    %302 = vmatpush1.msra.mxu0 0.0
    %303 = vmatprep.subr.mxu0 0.0
    %304 = vmatpush1.msra.mxu0 0.0
    %305 = vmatprep.subr.mxu0 0.0
    %306 = vmatpush1.msra.mxu0 0.0
    %307 = vmatprep.subr.mxu0 0.0
    %308 = vmatpush1.msra.mxu0 0.0
    %309 = vmatprep.mubr.f32.mxu0 0.0
    %310 = vmatmul.mubr.f32.gmra.mrb[0].mxu0 %v243
    %v311 = vpop.f32.mrb[0].mxu0
    %v312 = vadd.f32 0.0, %v311
    %v313 = vpop.f32.mrb[0].mxu0
    %314 = vdwg.mxu0
    %v315 = vmul.f32 %v312, %v312
    %v316 = vsel %vm125, %v315, 0.0
    %317 = vadd.xlane.f32.xlu0 %v316
    %v318 = vpop.xlane.xlu0 %317
    %v319 = vrsqrt.pop %v318
    %v320 = vmul.f32 %v318, %v319
    %vm321 = vcmp.eq.f32.partialorder %v318, inf
    %v322 = vsel %vm321, %v318, %v320
    %vm323 = vcmp.eq.f32.partialorder %v318, 0.0
    %v324 = vand.u32 %v318, 2147483648
    %v325 = vsel %vm323, %v324, %v322
    %v326 = vmax.f32 %v325, 1e-12
    %v327 = vrcp.pop %v326
    %v328 = vmul.f32 %v312, %v327
    %330 = vrot.lane.b32.xlu0 %v232, 32
    %v331 = vpop.permute.xlu0 %330
    %334 = vrot.lane.b32.xlu0 %v328, 64
    %v335 = vpop.permute.xlu0 %334
    %v337 = vsel %vm125, %v138, %v331
    %vm338 = vcmask 523264
    %v339 = vsel %vm338, %v337, %v335
    %v340 = vld [vmem:[%s5] sm:$0xff]
    %v341 = vld [vmem:[%s5 + $0x8] sm:$0xff]
    %v342 = vld [vmem:[%s5 + $0x10] sm:$0xff]
    %v343 = vld [vmem:[%s5 + $0x18] sm:$0xff]
    %v344 = vld [vmem:[%s5 + $0x20] sm:$0xff]
    %v345 = vld [vmem:[%s5 + $0x28] sm:$0xff]
    %v346 = vld [vmem:[%s5 + $0x30] sm:$0xff]
    %v347 = vld [vmem:[%s5 + $0x38] sm:$0xff]
    %v348 = vld [vmem:[%s5 + $0x40] sm:$0xff]
    %v349 = vld [vmem:[%s5 + $0x48] sm:$0xff]
    %v350 = vld [vmem:[%s5 + $0x50] sm:$0xff]
    %v351 = vld [vmem:[%s5 + $0x58] sm:$0xff]
    %v352 = vld [vmem:[%s5 + $0x60] sm:$0xff]
    %v353 = vld [vmem:[%s5 + $0x68] sm:$0xff]
    %v354 = vld [vmem:[%s5 + $0x70] sm:$0xff]
    %v355 = vld [vmem:[%s5 + $0x78] sm:$0xff]
    %v356 = vld [vmem:[%s5 + $0x80] sm:$0xff]
    %v357 = vld [vmem:[%s5 + $0x88] sm:$0xff]
    %v358 = vld [vmem:[%s5 + $0x90] sm:$0xff]
    %v359 = vld [vmem:[%s5 + $0x98] sm:$0xff]
    %v360 = vld [vmem:[%s5 + $0xa0] sm:$0xff]
    %v361 = vld [vmem:[%s5 + $0xa8] sm:$0xff]
    %v362 = vld [vmem:[%s5 + $0xb0] sm:$0xff]
    %v363 = vld [vmem:[%s5 + $0xb8] sm:$0xff]
    %v364 = vld [vmem:[%s6] sm:$0x3]
    %v366 = vlaneseq
    %v367 = vshrl.u32 %v366, 7
    %v368 = vsub.s32 0, %v367
    %v369 = vrot.slane %v364, %v368
    %v370 = vlaneseq
    %v371 = vshrl.u32 %v370, 7
    %v372 = vsub.s32 1, %v371
    %v373 = vrot.slane %v364, %v372
    %vm376 = vcmask 785408
    %v378 = vsel %vm376, %v339, 0
    %380 = vmatprep.subr.mxu0 %v341
    %381 = vmatpush1.msra.mxu0 %v340
    %382 = vmatprep.subr.mxu0 %v343
    %383 = vmatpush1.msra.mxu0 %v342
    %384 = vmatprep.subr.mxu0 %v345
    %385 = vmatpush1.msra.mxu0 %v344
    %386 = vmatprep.subr.mxu0 %v347
    %387 = vmatpush1.msra.mxu0 %v346
    %388 = vmatprep.subr.mxu0 %v349
    %389 = vmatpush1.msra.mxu0 %v348
    %390 = vmatprep.subr.mxu0 %v351
    %391 = vmatpush1.msra.mxu0 %v350
    %392 = vmatprep.subr.mxu0 %v353
    %393 = vmatpush1.msra.mxu0 %v352
    %394 = vmatprep.subr.mxu0 %v355
    %395 = vmatpush1.msra.mxu0 %v354
    %396 = vmatprep.subr.mxu0 %v357
    %397 = vmatpush1.msra.mxu0 %v356
    %398 = vmatprep.subr.mxu0 %v359
    %399 = vmatpush1.msra.mxu0 %v358
    %400 = vmatprep.subr.mxu0 %v361
    %401 = vmatpush1.msra.mxu0 %v360
    %402 = vmatprep.subr.mxu0 %v363
    %403 = vmatpush1.msra.mxu0 %v362
    %404 = vmatprep.subr.mxu0 0.0
    %405 = vmatpush1.msra.mxu0 0.0
    %406 = vmatprep.subr.mxu0 0.0
    %407 = vmatpush1.msra.mxu0 0.0
    %408 = vmatprep.subr.mxu0 0.0
    %409 = vmatpush1.msra.mxu0 0.0
    %410 = vmatprep.subr.mxu0 0.0
    %411 = vmatpush1.msra.mxu0 0.0
    %412 = vmatprep.subr.mxu0 0.0
    %413 = vmatpush1.msra.mxu0 0.0
    %414 = vmatprep.subr.mxu0 0.0
    %415 = vmatpush1.msra.mxu0 0.0
    %416 = vmatprep.subr.mxu0 0.0
    %417 = vmatpush1.msra.mxu0 0.0
    %418 = vmatprep.subr.mxu0 0.0
    %419 = vmatpush1.msra.mxu0 0.0
    %420 = vmatprep.subr.mxu0 0.0
    %421 = vmatpush1.msra.mxu0 0.0
    %422 = vmatprep.subr.mxu0 0.0
    %423 = vmatpush1.msra.mxu0 0.0
    %424 = vmatprep.subr.mxu0 0.0
    %425 = vmatpush1.msra.mxu0 0.0
    %426 = vmatprep.subr.mxu0 0.0
    %427 = vmatpush1.msra.mxu0 0.0
    %428 = vmatprep.subr.mxu0 0.0
    %429 = vmatpush1.msra.mxu0 0.0
    %430 = vmatprep.subr.mxu0 0.0
    %431 = vmatpush1.msra.mxu0 0.0
    %432 = vmatprep.subr.mxu0 0.0
    %433 = vmatpush1.msra.mxu0 0.0
    %434 = vmatprep.subr.mxu0 0.0
    %435 = vmatpush1.msra.mxu0 0.0
    %436 = vmatprep.subr.mxu0 0.0
    %437 = vmatpush1.msra.mxu0 0.0
    %438 = vmatprep.subr.mxu0 0.0
    %439 = vmatpush1.msra.mxu0 0.0
    %440 = vmatprep.subr.mxu0 0.0
    %441 = vmatpush1.msra.mxu0 0.0
    %442 = vmatprep.subr.mxu0 0.0
    %443 = vmatpush1.msra.mxu0 0.0
    %444 = vmatprep.mubr.f32.mxu0 0.0
    %445 = vmatmul.mubr.f32.gmra.mrb[0].mxu0 %v378
    %v446 = vpop.f32.mrb[0].mxu0
    %v447 = vadd.f32 %v369, %v446
    %v448 = vpop.f32.mrb[0].mxu0
    %v449 = vadd.f32 %v373, %v448
    %450 = vdwg.mxu0
    %v451 = vmax.f32 %v447, 0.0
    %v452 = vmax.f32 %v449, 0.0
    %v453 = vld [vmem:[%s7] sm:$0xff]
    %v454 = vld [vmem:[%s7 + $0x8] sm:$0xff]
    %v455 = vld [vmem:[%s7 + $0x10] sm:$0xff]
    %v456 = vld [vmem:[%s7 + $0x18] sm:$0xff]
    %v457 = vld [vmem:[%s7 + $0x20] sm:$0xff]
    %v458 = vld [vmem:[%s7 + $0x28] sm:$0xff]
    %v459 = vld [vmem:[%s7 + $0x30] sm:$0xff]
    %v460 = vld [vmem:[%s7 + $0x38] sm:$0xff]
    %v461 = vld [vmem:[%s7 + $0x40] sm:$0xff]
    %v462 = vld [vmem:[%s7 + $0x48] sm:$0xff]
    %v463 = vld [vmem:[%s7 + $0x50] sm:$0xff]
    %v464 = vld [vmem:[%s7 + $0x58] sm:$0xff]
    %v465 = vld [vmem:[%s7 + $0x60] sm:$0xff]
    %v466 = vld [vmem:[%s7 + $0x68] sm:$0xff]
    %v467 = vld [vmem:[%s7 + $0x70] sm:$0xff]
    %v468 = vld [vmem:[%s7 + $0x78] sm:$0xff]
    %v469 = vld [vmem:[%s7 + $0x80] sm:$0xff]
    %v470 = vld [vmem:[%s7 + $0x88] sm:$0xff]
    %v471 = vld [vmem:[%s7 + $0x90] sm:$0xff]
    %v472 = vld [vmem:[%s7 + $0x98] sm:$0xff]
    %v473 = vld [vmem:[%s7 + $0xa0] sm:$0xff]
    %v474 = vld [vmem:[%s7 + $0xa8] sm:$0xff]
    %v475 = vld [vmem:[%s7 + $0xb0] sm:$0xff]
    %v476 = vld [vmem:[%s7 + $0xb8] sm:$0xff]
    %v477 = vld [vmem:[%s8] sm:$0x1]
    %v479 = vlaneseq
    %v480 = vshrl.u32 %v479, 7
    %v481 = vsub.s32 0, %v480
    %v482 = vrot.slane %v477, %v481
    %v485 = vsel %vm338, %v452, 0
    %487 = vmatprep.subr.mxu0 0.0
    %488 = vmatpush1.msra.mxu0 %v453
    %489 = vmatprep.subr.mxu0 0.0
    %490 = vmatpush1.msra.mxu0 %v454
    %491 = vmatprep.subr.mxu0 0.0
    %492 = vmatpush1.msra.mxu0 %v455
    %493 = vmatprep.subr.mxu0 0.0
    %494 = vmatpush1.msra.mxu0 %v456
    %495 = vmatprep.subr.mxu0 0.0
    %496 = vmatpush1.msra.mxu0 %v457
    %497 = vmatprep.subr.mxu0 0.0
    %498 = vmatpush1.msra.mxu0 %v458
    %499 = vmatprep.subr.mxu0 0.0
    %500 = vmatpush1.msra.mxu0 %v459
    %501 = vmatprep.subr.mxu0 0.0
    %502 = vmatpush1.msra.mxu0 %v460
    %503 = vmatprep.subr.mxu0 0.0
    %504 = vmatpush1.msra.mxu0 %v461
    %505 = vmatprep.subr.mxu0 0.0
    %506 = vmatpush1.msra.mxu0 %v462
    %507 = vmatprep.subr.mxu0 0.0
    %508 = vmatpush1.msra.mxu0 %v463
    %509 = vmatprep.subr.mxu0 0.0
    %510 = vmatpush1.msra.mxu0 %v464
    %511 = vmatprep.subr.mxu0 0.0
    %512 = vmatpush1.msra.mxu0 %v465
    %513 = vmatprep.subr.mxu0 0.0
    %514 = vmatpush1.msra.mxu0 %v466
    %515 = vmatprep.subr.mxu0 0.0
    %516 = vmatpush1.msra.mxu0 %v467
    %517 = vmatprep.subr.mxu0 0.0
    %518 = vmatpush1.msra.mxu0 %v468
    %519 = vmatprep.subr.mxu0 0.0
    %520 = vmatpush1.msra.mxu0 %v469
    %521 = vmatprep.subr.mxu0 0.0
    %522 = vmatpush1.msra.mxu0 %v470
    %523 = vmatprep.subr.mxu0 0.0
    %524 = vmatpush1.msra.mxu0 %v471
    %525 = vmatprep.subr.mxu0 0.0
    %526 = vmatpush1.msra.mxu0 %v472
    %527 = vmatprep.subr.mxu0 0.0
    %528 = vmatpush1.msra.mxu0 %v473
    %529 = vmatprep.subr.mxu0 0.0
    %530 = vmatpush1.msra.mxu0 %v474
    %531 = vmatprep.subr.mxu0 0.0
    %532 = vmatpush1.msra.mxu0 %v475
    %533 = vmatprep.subr.mxu0 0.0
    %534 = vmatpush1.msra.mxu0 %v476
    %535 = vmatprep.subr.mxu0 0.0
    %536 = vmatpush1.msra.mxu0 0.0
    %537 = vmatprep.subr.mxu0 0.0
    %538 = vmatpush1.msra.mxu0 0.0
    %539 = vmatprep.subr.mxu0 0.0
    %540 = vmatpush1.msra.mxu0 0.0
    %541 = vmatprep.subr.mxu0 0.0
    %542 = vmatpush1.msra.mxu0 0.0
    %543 = vmatprep.subr.mxu0 0.0
    %544 = vmatpush1.msra.mxu0 0.0
    %545 = vmatprep.subr.mxu0 0.0
    %546 = vmatpush1.msra.mxu0 0.0
    %547 = vmatprep.subr.mxu0 0.0
    %548 = vmatpush1.msra.mxu0 0.0
    %549 = vmatprep.subr.mxu0 0.0
    %550 = vmatpush1.msra.mxu0 0.0
    %551 = vmatprep.mubr.f32.mxu0 %v485
    %552 = vmatmul.mubr.f32.gmra.mrb[0].mxu0 %v451
    %v553 = vpop.f32.mrb[0].mxu0
    %v554 = vadd.f32 %v482, %v553
    %v555 = vpop.f32.mrb[0].mxu0
    %556 = vdwg.mxu0
    %v557 = vmax.f32 %v554, 0.0
    %v558 = vld [vmem:[%s9] sm:$0xff]
    %v559 = vld [vmem:[%s9 + $0x8] sm:$0xff]
    %v560 = vld [vmem:[%s9 + $0x10] sm:$0xff]
    %v561 = vld [vmem:[%s9 + $0x18] sm:$0xff]
    %v562 = vld [vmem:[%s9 + $0x20] sm:$0xff]
    %v563 = vld [vmem:[%s9 + $0x28] sm:$0xff]
    %v564 = vld [vmem:[%s9 + $0x30] sm:$0xff]
    %v565 = vld [vmem:[%s9 + $0x38] sm:$0xff]
    %v566 = vld [vmem:[%s10] sm:$0x1]
    %v568 = vlaneseq
    %v569 = vshrl.u32 %v568, 7
    %v570 = vsub.s32 0, %v569
    %v571 = vrot.slane %v566, %v570
    %v574 = vsel %vm338, %v557, 0
    %576 = vmatprep.subr.mxu0 0.0
    %577 = vmatpush1.msra.mxu0 %v558
    %578 = vmatprep.subr.mxu0 0.0
    %579 = vmatpush1.msra.mxu0 %v559
    %580 = vmatprep.subr.mxu0 0.0
    %581 = vmatpush1.msra.mxu0 %v560
    %582 = vmatprep.subr.mxu0 0.0
    %583 = vmatpush1.msra.mxu0 %v561
    %584 = vmatprep.subr.mxu0 0.0
    %585 = vmatpush1.msra.mxu0 %v562
    %586 = vmatprep.subr.mxu0 0.0
    %587 = vmatpush1.msra.mxu0 %v563
    %588 = vmatprep.subr.mxu0 0.0
    %589 = vmatpush1.msra.mxu0 %v564
    %590 = vmatprep.subr.mxu0 0.0
    %591 = vmatpush1.msra.mxu0 %v565
    %592 = vmatprep.subr.mxu0 0.0
    %593 = vmatpush1.msra.mxu0 0.0
    %594 = vmatprep.subr.mxu0 0.0
    %595 = vmatpush1.msra.mxu0 0.0
    %596 = vmatprep.subr.mxu0 0.0
    %597 = vmatpush1.msra.mxu0 0.0
    %598 = vmatprep.subr.mxu0 0.0
    %599 = vmatpush1.msra.mxu0 0.0
    %600 = vmatprep.subr.mxu0 0.0
    %601 = vmatpush1.msra.mxu0 0.0
    %602 = vmatprep.subr.mxu0 0.0
    %603 = vmatpush1.msra.mxu0 0.0
    %604 = vmatprep.subr.mxu0 0.0
    %605 = vmatpush1.msra.mxu0 0.0
    %606 = vmatprep.subr.mxu0 0.0
    %607 = vmatpush1.msra.mxu0 0.0
    %608 = vmatprep.subr.mxu0 0.0
    %609 = vmatpush1.msra.mxu0 0.0
    %610 = vmatprep.subr.mxu0 0.0
    %611 = vmatpush1.msra.mxu0 0.0
    %612 = vmatprep.subr.mxu0 0.0
    %613 = vmatpush1.msra.mxu0 0.0
    %614 = vmatprep.subr.mxu0 0.0
    %615 = vmatpush1.msra.mxu0 0.0
    %616 = vmatprep.subr.mxu0 0.0
    %617 = vmatpush1.msra.mxu0 0.0
    %618 = vmatprep.subr.mxu0 0.0
    %619 = vmatpush1.msra.mxu0 0.0
    %620 = vmatprep.subr.mxu0 0.0
    %621 = vmatpush1.msra.mxu0 0.0
    %622 = vmatprep.subr.mxu0 0.0
    %623 = vmatpush1.msra.mxu0 0.0
    %624 = vmatprep.subr.mxu0 0.0
    %625 = vmatpush1.msra.mxu0 0.0
    %626 = vmatprep.subr.mxu0 0.0
    %627 = vmatpush1.msra.mxu0 0.0
    %628 = vmatprep.subr.mxu0 0.0
    %629 = vmatpush1.msra.mxu0 0.0
    %630 = vmatprep.subr.mxu0 0.0
    %631 = vmatpush1.msra.mxu0 0.0
    %632 = vmatprep.subr.mxu0 0.0
    %633 = vmatpush1.msra.mxu0 0.0
    %634 = vmatprep.subr.mxu0 0.0
    %635 = vmatpush1.msra.mxu0 0.0
    %636 = vmatprep.subr.mxu0 0.0
    %637 = vmatpush1.msra.mxu0 0.0
    %638 = vmatprep.subr.mxu0 0.0
    %639 = vmatpush1.msra.mxu0 0.0
    %640 = vmatprep.mubr.f32.mxu0 0.0
    %641 = vmatmul.mubr.f32.gmra.mrb[0].mxu0 %v574
    %v642 = vpop.f32.mrb[0].mxu0
    %v643 = vadd.f32 %v571, %v642
    %v644 = vpop.f32.mrb[0].mxu0
    %645 = vdwg.mxu0
    %646 = vst.msk [vmem:[#allocation2] sm:$0xff] %vm241, %v643
    // Predicated region
    $region46: #{tpu_custom_call.1} parent=1 // pred_check
      _
    $region47: #{tpu_custom_call.1} parent=1 // pred_check_branch
      %648 = sbr.rel (0) target = $region49
    $region48: #{tpu_custom_call.1} parent=1 // pred_region
      %s650 = ssub.s32 128, 128
      %651 = vsyncadd [#allocation3], %s650
      %s653 = sshll.u32 [#allocation2], 4
      %s654 = int_to_ptr.vmem [resolvable:$true] %s653
      %656 = dma.vmem_to_hbm [thread:$0]  %s654, 128, %s11, [#allocation3]
    $region49: #{tpu_custom_call.1} parent=1 // pred_fallthru
      _
    // Predicated region
    $region50: #{tpu_custom_call.1} parent=1 // pred_check
      _
    $region51: #{tpu_custom_call.1} parent=1 // pred_check_branch
      %658 = sbr.rel (0) target = $region53
    $region52: #{tpu_custom_call.1} parent=1 // pred_region
      %659 = dma.done [#allocation3], 128
    $region53: #{tpu_custom_call.1} parent=1 // pred_fallthru
      _
    %660 = vsyncpa [#allocation3], 1

</llo_original>
